<compile_context>
chip_gen: v7x
topology: tpu7x:2x2x1
jax: 0.10.0
libtpu: 0.0.40
codegen_flags: <defaults>
</compile_context>

<pallas_src>
import functools

import jax
import jax.numpy as jnp
from jax.experimental import pallas as pl
from jax.experimental.pallas import tpu as pltpu


# --------------------------------- kernels -----------------------------------

def _lhs_kernel(flat_ref, w1_ref, b1_ref, lhs_ref, *, K):
    # flat_ref: (TB, K) bf16   w1_ref: (K, hidden) bf16   b1_ref: (1, hidden) f32
    # lhs_ref:  (TB, K+hidden) bf16  -> [flat | tanh(flat @ w1 + b1)]
    flat = flat_ref[...]
    h = jnp.tanh(
        jnp.dot(flat, w1_ref[...], preferred_element_type=jnp.float32) + b1_ref[...]
    )
    lhs_ref[:, :K] = flat
    lhs_ref[:, K:] = h.astype(lhs_ref.dtype)


def _logits_kernel(lhs_ref, w23_ref, b23_ref, out_ref):
    # lhs_ref: (TB, K+hidden) bf16   w23_ref: (K+hidden, TV) bf16
    # b23_ref: (1, TV) f32           out_ref: (TB, TV) bf16
    acc = jnp.dot(lhs_ref[...], w23_ref[...], preferred_element_type=jnp.float32)
    out_ref[...] = (acc + b23_ref[...]).astype(out_ref.dtype)


# ------------------------------ param packing ---------------------------------

def prepare_params(C, W1, b1, W2, b2, W3, b3, *, param_dtype=jnp.bfloat16):
    """One-time conversion from PyTorch layout (out, in) to kernel layout (in, out).

    Does the transposes, the bf16 cast, the b2+b3 bias fold, the w2/w3 stacking
    into one fused weight, and the vocab padding exactly once (at init).
    """
    hidden, K = W1.shape
    v = W2.shape[0]
    v_pad = ((v + 127) // 128) * 128

    w23 = jnp.concatenate([W2.T, W3.T], axis=0).astype(param_dtype)   # (K+hidden, v)
    b23 = (b2 + b3).reshape(1, v).astype(jnp.float32)                 # (1, v)
    if v_pad != v:
        w23 = jnp.pad(w23, ((0, 0), (0, v_pad - v)))
        b23 = jnp.pad(b23, ((0, 0), (0, v_pad - v)))

    return dict(
        C=C.astype(param_dtype),                       # (v, d)
        w1t=W1.T.astype(param_dtype),                  # (K, hidden)
        b1=b1.reshape(1, hidden).astype(jnp.float32),  # (1, hidden)
        w23=w23,                                       # (K+hidden, v_pad) fused
        b23=b23,                                       # (1, v_pad)       fused
        v=v,                                           # true vocab size
    )


# --------------------------------- forward ------------------------------------

def fnnlm_forward(x_ids, params, *, tile_b=None, tile_v=None, out_dtype=jnp.bfloat16):
    """x_ids: (B, step) int32 tokens. params: output of prepare_params()."""
    C, w1t, b1 = params["C"], params["w1t"], params["b1"]
    w23, b23, v = params["w23"], params["b23"], params["v"]

    B, step = x_ids.shape
    _, d = C.shape
    K, hidden = w1t.shape
    Kh, v_pad = w23.shape
    assert K == step * d and Kh == K + hidden

    # Embedding lookup + flatten (small; JAX glue). bf16 so activations stream
    # at half the bytes.
    flat = jnp.take(C, x_ids, axis=0).reshape(B, K)

    # --- Tile selection -------------------------------------------------------
    if tile_b is None:
        tile_b = min(B, 256)
    if B % tile_b != 0:
        tile_b = B

    if tile_v is None:
        # Largest lane-dense slab (multiple of 256 preferred for the 2x256 MXU)
        # that divides v_pad and fits a conservative double-buffered VMEM budget
        # (works under v7x's 64 MiB physical / 32 MiB scoped and v5e's 16 MiB
        # scope once vmem_limit_bytes is raised below).
        budget = 20 * 1024 * 1024
        tile_v = 128
        for cand in (4096, 2048, 1024, 512, 256, 128):
            if v_pad % cand == 0:
                need = 2 * (Kh * cand * 2          # w23 slab (bf16)
                            + tile_b * cand * 2    # out slab (bf16)
                            + cand * 4             # bias slab (f32)
                            + tile_b * Kh * 2)     # lhs (bf16)
                if need <= budget:
                    tile_v = cand
                    break
    assert v_pad % tile_v == 0 and tile_v % 128 == 0

    # --- Prologue: lhs = [flat | tanh(flat @ w1 + b1)] (tiny, once per batch) --
    lhs = pl.pallas_call(
        functools.partial(_lhs_kernel, K=K),
        out_shape=jax.ShapeDtypeStruct((B, Kh), jnp.bfloat16),
        grid=(B // tile_b,),
        in_specs=[
            pl.BlockSpec((tile_b, K), lambda i: (i, 0)),
            pl.BlockSpec((K, hidden), lambda i: (0, 0)),
            pl.BlockSpec((1, hidden), lambda i: (0, 0)),
        ],
        out_specs=pl.BlockSpec((tile_b, Kh), lambda i: (i, 0)),
        compiler_params=pltpu.CompilerParams(
            dimension_semantics=("parallel",),
        ),
    )(flat, w1t, b1)

    # --- Main: single fused (K+hidden)-deep matmul, streamed over vocab slabs --
    # Vocab outer / batch inner: each weight slab is fetched from HBM exactly
    # once per sweep; lhs (tiny) is the only re-streamed operand.  No carried
    # scratch -> both axes independent -> both marked "parallel".
    grid = (v_pad // tile_v, B // tile_b)
    out = pl.pallas_call(
        _logits_kernel,
        out_shape=jax.ShapeDtypeStruct((B, v_pad), out_dtype),
        grid=grid,
        in_specs=[
            pl.BlockSpec((tile_b, Kh), lambda j, i: (i, 0)),      # lhs
            pl.BlockSpec((Kh, tile_v), lambda j, i: (0, j)),      # fused weight
            pl.BlockSpec((1, tile_v), lambda j, i: (0, j)),       # fused bias
        ],
        out_specs=pl.BlockSpec((tile_b, tile_v), lambda j, i: (i, j)),
        compiler_params=pltpu.CompilerParams(
            dimension_semantics=("parallel", "parallel"),
            vmem_limit_bytes=48 * 1024 * 1024,
        ),
    )(lhs, w23, b23)

    if v_pad != v:
        out = out[:, :v]
    return out


# ------------------------------- references -----------------------------------

def reference_matched(x_ids, params):
    """Pure-JAX reference using the SAME bf16-cast params as the kernel."""
    B, step = x_ids.shape
    K, hidden = params["w1t"].shape
    v = params["v"]
    flat = jnp.take(params["C"], x_ids, axis=0).reshape(B, K).astype(jnp.float32)
    w1 = params["w1t"].astype(jnp.float32)
    h = jnp.tanh(flat @ w1 + params["b1"]).astype(jnp.bfloat16).astype(jnp.float32)
    lhs = jnp.concatenate([flat, h], axis=1)
    out = lhs @ params["w23"].astype(jnp.float32) + params["b23"]
    return out[:, :v]


def reference_fp32(x_ids, C, W1, b1, W2, b2, W3, b3):
    """Exact PyTorch-semantics reference in f32 (original (out, in) layout)."""
    B, step = x_ids.shape
    _, d = C.shape
    flat = jnp.take(C, x_ids, axis=0).reshape(B, step * d)
    res1 = jnp.tanh(flat @ W1.T + b1)
    res2 = flat @ W2.T + b2
    res3 = res1 @ W3.T + b3
    return res2 + res3


# ----------------------------------- demo --------------------------------------

if __name__ == "__main__":
    # Small, lane-dense sizes consistent with the module (step*d = 128).
    v, d, step, hidden = 512, 16, 8, 128
    B = 8

    key = jax.random.PRNGKey(0)
    k_x, k_c, k_w1, k_b1, k_w2, k_b2, k_w3, k_b3 = jax.random.split(key, 8)

    x_ids = jax.random.randint(k_x, (B, step), 0, v, dtype=jnp.int32)

    # PyTorch parameter layout: weights are (out_features, in_features).
    C = jax.random.normal(k_c, (v, d), dtype=jnp.float32) * 0.1
    W1 = jax.random.normal(k_w1, (hidden, step * d), dtype=jnp.float32) * 0.05
    b1 = jax.random.normal(k_b1, (hidden,), dtype=jnp.float32) * 0.05
    W2 = jax.random.normal(k_w2, (v, step * d), dtype=jnp.float32) * 0.05
    b2 = jax.random.normal(k_b2, (v,), dtype=jnp.float32) * 0.05
    W3 = jax.random.normal(k_w3, (v, hidden), dtype=jnp.float32) * 0.05
    b3 = jax.random.normal(k_b3, (v,), dtype=jnp.float32) * 0.05

    # One-time layout / dtype / bias-fold / weight-stack / vocab-pad conversion.
    params = prepare_params(C, W1, b1, W2, b2, W3, b3)

    # tile_v=128 -> 4 vocab tiles, exercising the streaming pipeline.
    out = fnnlm_forward(x_ids, params, tile_v=128)
    out = jax.block_until_ready(out)

    assert out.shape == (B, v), out.shape
    out_f32 = out.astype(jnp.float32)

    # Compare against a reference quantized the same way (bf16 params + bf16 out).
    ref_m = reference_matched(x_ids, params).astype(jnp.bfloat16).astype(jnp.float32)
    ref_f = reference_fp32(x_ids, C, W1, b1, W2, b2, W3, b3)

    err_matched = float(jnp.max(jnp.abs(out_f32 - ref_m)))
    err_fp32 = float(jnp.max(jnp.abs(out_f32 - ref_f)))
    assert err_matched < 2e-3, f"mismatch vs bf16-matched reference: {err_matched}"
    assert err_fp32 < 2e-2, f"mismatch vs f32 reference: {err_fp32}"

    print("KERNEL_OK")
</pallas_src>

<mosaic_0001>
module attributes {stable_mosaic.version = 11 : i64} {
  func.func @_lhs_kernel(%arg0: i32, %arg1: memref<8x128xbf16, #tpu.memory_space<vmem>>, %arg2: memref<128x128xbf16, #tpu.memory_space<vmem>>, %arg3: memref<1x128xf32, #tpu.memory_space<vmem>>, %arg4: memref<8x256xbf16, #tpu.memory_space<vmem>>) attributes {dimension_semantics = [#tpu.dimension_semantics<parallel>], iteration_bounds = array<i64: 1>, scalar_prefetch = 0 : i64, scratch_operands = 0 : i64, tpu.core_type = #tpu.core_type<tc>, window_params = [{transform_indices = @transform_0, window_bounds = array<i64: 8, 128>}, {pipeline_mode = #tpu.pipeline_mode<synchronous>, transform_indices = @transform_1, window_bounds = array<i64: 128, 128>}, {pipeline_mode = #tpu.pipeline_mode<synchronous>, transform_indices = @transform_2, window_bounds = array<i64: 1, 128>}, {transform_indices = @transform_3, window_bounds = array<i64: 8, 256>}]} {
    %c0 = arith.constant 0 : index
    %c0_0 = arith.constant 0 : index
    %0 = vector.load %arg1[%c0, %c0_0] : memref<8x128xbf16, #tpu.memory_space<vmem>>, vector<8x128xbf16>
    %c0_1 = arith.constant 0 : index
    %c0_2 = arith.constant 0 : index
    %1 = vector.load %arg2[%c0_1, %c0_2] : memref<128x128xbf16, #tpu.memory_space<vmem>>, vector<128x128xbf16>
    %cst = arith.constant dense<0.000000e+00> : vector<8x128xf32>
    %2 = tpu.matmul %0, %1, %cst {dimension_numbers = #tpu.dot_dimension_numbers<[1], [0], [0], [1], [0, 0, 1, 1], [], []>} : vector<8x128xbf16>, vector<128x128xbf16>, vector<8x128xf32> -> vector<8x128xf32>
    %c0_3 = arith.constant 0 : index
    %c0_4 = arith.constant 0 : index
    %3 = vector.load %arg3[%c0_3, %c0_4] : memref<1x128xf32, #tpu.memory_space<vmem>>, vector<1x128xf32>
    %4 = vector.broadcast %3 : vector<1x128xf32> to vector<8x128xf32>
    %5 = arith.addf %2, %4 : vector<8x128xf32>
    %6 = math.tanh %5 : vector<8x128xf32>
    %c0_5 = arith.constant 0 : index
    %c0_6 = arith.constant 0 : index
    %7 = vector.load %arg4[%c0_5, %c0_6] : memref<8x256xbf16, #tpu.memory_space<vmem>>, vector<8x128xbf16>
    tpu.vector_store %arg4[%c0_5, %c0_6], %0 {strides = array<i32>} : memref<8x256xbf16, #tpu.memory_space<vmem>>, vector<8x128xbf16>,
    %8 = arith.truncf %6 : vector<8x128xf32> to vector<8x128xbf16>
    %c0_7 = arith.constant 0 : index
    %c128 = arith.constant 128 : index
    %9 = vector.load %arg4[%c0_7, %c128] : memref<8x256xbf16, #tpu.memory_space<vmem>>, vector<8x128xbf16>
    tpu.vector_store %arg4[%c0_7, %c128], %8 {strides = array<i32>} : memref<8x256xbf16, #tpu.memory_space<vmem>>, vector<8x128xbf16>,
    return
  }
  func.func @transform_0(%arg0: i32) -> (i32, i32) {
    %c0_i32 = arith.constant 0 : i32
    %c0_i32_0 = arith.constant 0 : i32
    return %arg0, %c0_i32 : i32, i32
  }
  func.func @transform_1(%arg0: i32) -> (i32, i32) {
    %c0_i32 = arith.constant 0 : i32
    %c0_i32_0 = arith.constant 0 : i32
    %c0_i32_1 = arith.constant 0 : i32
    return %c0_i32, %c0_i32_0 : i32, i32
  }
  func.func @transform_2(%arg0: i32) -> (i32, i32) {
    %c0_i32 = arith.constant 0 : i32
    %c0_i32_0 = arith.constant 0 : i32
    %c0_i32_1 = arith.constant 0 : i32
    return %c0_i32, %c0_i32_0 : i32, i32
  }
  func.func @transform_3(%arg0: i32) -> (i32, i32) {
    %c0_i32 = arith.constant 0 : i32
    %c0_i32_0 = arith.constant 0 : i32
    return %arg0, %c0_i32 : i32, i32
  }
}

</mosaic_0001>

<llo_original>
// kernel: tpu_custom_call.1
$region0: #{tpu_custom_call.1}
  #allocation0 [shape = 'u32[]', space=smem, size = 0x4, offset = 0x4, fixed_abs, tag = 'smem constant byte address 0x4 - core index']
  #allocation1 [shape = 'u32[144,128]{1,0:T(1,128)}', space=vmem, size = 0x12000, scoped, tag = 'internal scratch']
  %s0 = inlined_call_operand.hbm [shape: bf16[8,128], index: 0, kind: input, shape index: {}]
  %s1 = inlined_call_operand.hbm [shape: bf16[128,128], index: 1, kind: input, shape index: {}]
  %s2 = inlined_call_operand.vmem [shape: f32[1,128], index: 2, kind: input, shape index: {}]
  %s3 = inlined_call_operand.hbm [shape: bf16[8,256], index: 3, kind: output, shape index: {}]
  %s4 = sld [smem:[#allocation0]]
  $region30: #{tpu_custom_call.1} parent=0
    _
  %s6 = ssub.s32 1, %s4
  %s7 = scalar_select 0, %s6, %s4
  $region1: #{tpu_custom_call.1} parent=0
    #allocation2 [shape = 'u8[2048]{0}', space=vmem, size = 0x800, scoped, tag = 'input window, operand 0, single buffered']
    #allocation3 [shape = 's32[1]{0}', space=sflag, size = 0x4, scoped, tag = 'scoped memory for tpu_custom_call.1']
    #allocation4 [shape = 's32[1]{0}', space=sflag, size = 0x4, scoped, tag = 'scoped memory for tpu_custom_call.1']
    #allocation5 [shape = 'u8[32768]{0}', space=vmem, size = 0x8000, scoped, tag = 'input window, operand 1, single buffered']
    #allocation6 [shape = 's32[1]{0}', space=sflag, size = 0x4, scoped, tag = 'scoped memory for tpu_custom_call.1']
    #allocation7 [shape = 'u8[4096]{0}', space=vmem, size = 0x1000, scoped, tag = 'output window, operand 0, single buffered']
    %8 = vsyncpa [#allocation3], 0
    %9 = vsyncpa [#allocation6], 0
    %10 = vsyncpa [#allocation4], 0
    // Predicated region
    $region2: #{tpu_custom_call.1} parent=1 // pred_check
      _
    $region3: #{tpu_custom_call.1} parent=1 // pred_check_branch
      %12 = sbr.rel (0) target = $region5
    $region4: #{tpu_custom_call.1} parent=1 // pred_region
      %s14 = ssub.s32 64, 64
      %15 = vsyncadd [#allocation3], %s14
      %s17 = sshll.u32 [#allocation2], 4
      %s18 = int_to_ptr.vmem [resolvable:$true] %s17
      %20 = dma.hbm_to_vmem [thread:$0]  %s0, 64, %s18, [#allocation3]
    $region5: #{tpu_custom_call.1} parent=1 // pred_fallthru
      _
    // Predicated region
    $region6: #{tpu_custom_call.1} parent=1 // pred_check
      _
    $region7: #{tpu_custom_call.1} parent=1 // pred_check_branch
      %22 = sbr.rel (0) target = $region9
    $region8: #{tpu_custom_call.1} parent=1 // pred_region
      %s24 = ssub.s32 1024, 1024
      %25 = vsyncadd [#allocation6], %s24
      %s26 = sshll.u32 [#allocation5], 4
      %s27 = int_to_ptr.vmem [resolvable:$true] %s26
      %32 = dma.hbm_to_vmem [thread:$0]  %s1, 1024, %s27, [#allocation6], 64, 64, 4
    $region9: #{tpu_custom_call.1} parent=1 // pred_fallthru
      _
    // Predicated region
    $region10: #{tpu_custom_call.1} parent=1 // pred_check
      _
    $region11: #{tpu_custom_call.1} parent=1 // pred_check_branch
      %34 = sbr.rel (0) target = $region13
    $region12: #{tpu_custom_call.1} parent=1 // pred_region
      _
    $region13: #{tpu_custom_call.1} parent=1 // pred_fallthru
      _
    // Predicated region
    $region14: #{tpu_custom_call.1} parent=1 // pred_check
      _
    $region15: #{tpu_custom_call.1} parent=1 // pred_check_branch
      %36 = sbr.rel (0) target = $region17
    $region16: #{tpu_custom_call.1} parent=1 // pred_region
      %37 = dma.done [#allocation3], 64
    $region17: #{tpu_custom_call.1} parent=1 // pred_fallthru
      _
    // Predicated region
    $region18: #{tpu_custom_call.1} parent=1 // pred_check
      _
    $region19: #{tpu_custom_call.1} parent=1 // pred_check_branch
      %39 = sbr.rel (0) target = $region21
    $region20: #{tpu_custom_call.1} parent=1 // pred_region
      %40 = dma.done [#allocation6], 1024
    $region21: #{tpu_custom_call.1} parent=1 // pred_fallthru
      _
    %v42 = vld [vmem:[#allocation2] sm:$0xf]
    %v43 = vld [vmem:[#allocation5] sm:$0xf]
    %v44 = vld [vmem:[#allocation5 + $0x4] sm:$0xf]
    %v45 = vld [vmem:[#allocation5 + $0x8] sm:$0xf]
    %v46 = vld [vmem:[#allocation5 + $0xc] sm:$0xf]
    %v47 = vld [vmem:[#allocation5 + $0x10] sm:$0xf]
    %v48 = vld [vmem:[#allocation5 + $0x14] sm:$0xf]
    %v49 = vld [vmem:[#allocation5 + $0x18] sm:$0xf]
    %v50 = vld [vmem:[#allocation5 + $0x1c] sm:$0xf]
    %v51 = vld [vmem:[#allocation5 + $0x20] sm:$0xf]
    %v52 = vld [vmem:[#allocation5 + $0x24] sm:$0xf]
    %v53 = vld [vmem:[#allocation5 + $0x28] sm:$0xf]
    %v54 = vld [vmem:[#allocation5 + $0x2c] sm:$0xf]
    %v55 = vld [vmem:[#allocation5 + $0x30] sm:$0xf]
    %v56 = vld [vmem:[#allocation5 + $0x34] sm:$0xf]
    %v57 = vld [vmem:[#allocation5 + $0x38] sm:$0xf]
    %v58 = vld [vmem:[#allocation5 + $0x3c] sm:$0xf]
    %v59 = vld [vmem:[%s2] sm:$0x1]
    %v61 = vlaneseq
    %v62 = vshrl.u32 %v61, 7
    %v63 = vsub.s32 0, %v62
    %v64 = vrot.slane %v59, %v63
    %v82 = vunpack.c.l.b16 %v43
    %v83 = vunpack.c.l.b16 %v44
    %v84 = vunpack.c.l.b16 %v45
    %v85 = vunpack.c.l.b16 %v46
    %v86 = vunpack.c.l.b16 %v47
    %v87 = vunpack.c.l.b16 %v48
    %v88 = vunpack.c.l.b16 %v49
    %v89 = vunpack.c.l.b16 %v50
    %v90 = vunpack.c.l.b16 %v51
    %v91 = vunpack.c.l.b16 %v52
    %v92 = vunpack.c.l.b16 %v53
    %v93 = vunpack.c.l.b16 %v54
    %v94 = vunpack.c.l.b16 %v55
    %v95 = vunpack.c.l.b16 %v56
    %v96 = vunpack.c.l.b16 %v57
    %v97 = vunpack.c.l.b16 %v58
    %v98 = vpack.c.b16 %v83, %v82
    %v99 = vpack.c.b16 %v85, %v84
    %v100 = vpack.c.b16 %v87, %v86
    %v101 = vpack.c.b16 %v89, %v88
    %v102 = vpack.c.b16 %v91, %v90
    %v103 = vpack.c.b16 %v93, %v92
    %v104 = vpack.c.b16 %v95, %v94
    %v105 = vpack.c.b16 %v97, %v96
    %114 = vmatprep.subr.bf16.mxu0 0
    %115 = vmatpush1.bf16.msra.mxu0 %v98
    %116 = vmatprep.subr.bf16.mxu0 0
    %117 = vmatpush1.bf16.msra.mxu0 %v99
    %118 = vmatprep.subr.bf16.mxu0 0
    %119 = vmatpush1.bf16.msra.mxu0 %v100
    %120 = vmatprep.subr.bf16.mxu0 0
    %121 = vmatpush1.bf16.msra.mxu0 %v101
    %122 = vmatprep.subr.bf16.mxu0 0
    %123 = vmatpush1.bf16.msra.mxu0 %v102
    %124 = vmatprep.subr.bf16.mxu0 0
    %125 = vmatpush1.bf16.msra.mxu0 %v103
    %126 = vmatprep.subr.bf16.mxu0 0
    %127 = vmatpush1.bf16.msra.mxu0 %v104
    %128 = vmatprep.subr.bf16.mxu0 0
    %129 = vmatpush1.bf16.msra.mxu0 %v105
    %130 = vmatprep.subr.bf16.mxu0 0
    %131 = vmatpush1.bf16.msra.mxu0 0
    %132 = vmatprep.subr.bf16.mxu0 0
    %133 = vmatpush1.bf16.msra.mxu0 0
    %134 = vmatprep.subr.bf16.mxu0 0
    %135 = vmatpush1.bf16.msra.mxu0 0
    %136 = vmatprep.subr.bf16.mxu0 0
    %137 = vmatpush1.bf16.msra.mxu0 0
    %138 = vmatprep.subr.bf16.mxu0 0
    %139 = vmatpush1.bf16.msra.mxu0 0
    %140 = vmatprep.subr.bf16.mxu0 0
    %141 = vmatpush1.bf16.msra.mxu0 0
    %142 = vmatprep.subr.bf16.mxu0 0
    %143 = vmatpush1.bf16.msra.mxu0 0
    %144 = vmatprep.subr.bf16.mxu0 0
    %145 = vmatpush1.bf16.msra.mxu0 0
    %146 = vmatprep.mubr.bf16.mxu0 0
    %147 = vmatmul.mubr.bf16.gmra.mrb[0].mxu0 %v42
    %v148 = vpop.f32.mrb[0].mxu0
    %v149 = vadd.f32 %v64, %v148
    %v150 = vpop.f32.mrb[0].mxu0
    %v151 = vpop.f32.mrb[0].mxu0
    %v152 = vpop.f32.mrb[0].mxu0
    %153 = vdwg.mxu0
    %v154 = vtanh.pop %v149
    %155 = vst [vmem:[#allocation7] sm:$0xf] %v42
    %v156 = vpack.c.bf16 %v154, %v154
    %157 = vst [vmem:[#allocation7 + $0x4] sm:$0xf] %v156
    // Predicated region
    $region22: #{tpu_custom_call.1} parent=1 // pred_check
      _
    $region23: #{tpu_custom_call.1} parent=1 // pred_check_branch
      %159 = sbr.rel (0) target = $region25
    $region24: #{tpu_custom_call.1} parent=1 // pred_region
      %s161 = ssub.s32 128, 128
      %162 = vsyncadd [#allocation4], %s161
      %s164 = sshll.u32 [#allocation7], 4
      %s165 = int_to_ptr.vmem [resolvable:$true] %s164
      %167 = dma.vmem_to_hbm [thread:$0]  %s165, 128, %s3, [#allocation4]
    $region25: #{tpu_custom_call.1} parent=1 // pred_fallthru
      _
    // Predicated region
    $region26: #{tpu_custom_call.1} parent=1 // pred_check
      _
    $region27: #{tpu_custom_call.1} parent=1 // pred_check_branch
      %169 = sbr.rel (0) target = $region29
    $region28: #{tpu_custom_call.1} parent=1 // pred_region
      %170 = dma.done [#allocation4], 128
    $region29: #{tpu_custom_call.1} parent=1 // pred_fallthru
      _
    %171 = vsyncpa [#allocation3], 1
    %172 = vsyncpa [#allocation6], 1
    %173 = vsyncpa [#allocation4], 1

</llo_original>
